<compile_context>
chip_gen: v5e
topology: v5e:2x2
jax: 0.10.0
libtpu: 0.0.40
codegen_flags: <defaults>
</compile_context>

<pallas_src>
from functools import partial

import jax
import jax.numpy as jnp
from jax.experimental import pallas as pl
from jax.experimental.pallas import tpu as pltpu


# ----------------------------- fused kernel ---------------------------------

def _lrm_fused_kernel(de_ref, en_ref, gate_ref, o_ref):
    # de_ref:   (1, c_de, hw)   decoder features  (whole batch slab)
    # en_ref:   (1, c_en, hw)   encoder features  (whole batch slab)
    # gate_ref: (1, gc,  hw)    gate map, gc in {1, c_de}
    # o_ref:    (1, c_de, hw)
    de = de_ref[0]                                             # (c_de, hw)
    en = en_ref[0]                                             # (c_en, hw)

    # energy = de @ en.T  (contract the pixel/lane axis of both operands)
    energy = jax.lax.dot_general(
        de, en, (((1,), (1,)), ((), ())),
        preferred_element_type=jnp.float32)                    # (c_de, c_en) f32

    m = jnp.max(energy, axis=-1, keepdims=True)
    energy_new = m - energy                                    # torch: max - energy
    mm = jnp.max(energy_new, axis=-1, keepdims=True)           # stable softmax
    e = jnp.exp(energy_new - mm)
    attn = e / jnp.sum(e, axis=-1, keepdims=True)              # (c_de, c_en) f32

    out = jnp.dot(attn.astype(en.dtype), en,
                  preferred_element_type=jnp.float32)          # (c_de, hw) f32
    gate = jax.nn.sigmoid(gate_ref[0].astype(jnp.float32))     # (gc, hw)
    o_ref[0] = (out * gate).astype(o_ref.dtype)


# --------------------------- tiled fallback kernels --------------------------

def _energy_attn_kernel(de_ref, en_ref, attn_ref, acc_ref):
    # de_ref:   (1, c_de, TP)    decoder spatial tile
    # en_ref:   (1, c_en, TP)    encoder spatial tile
    # attn_ref: (1, c_de, c_en)  per-batch channel-attention map (f32 output)
    # acc_ref:  (c_de, c_en)     f32 energy accumulator (VMEM scratch)
    si = pl.program_id(1)

    @pl.when(si == 0)
    def _():
        acc_ref[...] = jnp.zeros_like(acc_ref)

    # energy += de @ en.T  (contract over the pixel/lane axis)
    acc_ref[...] += jax.lax.dot_general(
        de_ref[0], en_ref[0], (((1,), (1,)), ((), ())),
        preferred_element_type=jnp.float32)

    @pl.when(si == pl.num_programs(1) - 1)
    def _():
        energy = acc_ref[...]
        m = jnp.max(energy, axis=-1, keepdims=True)
        energy_new = m - energy                                # torch: max - energy
        mm = jnp.max(energy_new, axis=-1, keepdims=True)       # stable softmax
        e = jnp.exp(energy_new - mm)
        attn_ref[0] = (e / jnp.sum(e, axis=-1, keepdims=True)).astype(attn_ref.dtype)


def _apply_kernel(attn_ref, en_ref, gate_ref, o_ref):
    # attn_ref: (1, c_de, c_en) f32
    # en_ref:   (1, c_en, TP)
    # gate_ref: (1, gc,  TP)
    # o_ref:    (1, c_de, TP)   lane-dense store
    en = en_ref[0]
    attn = attn_ref[0].astype(en.dtype)                        # MXU-friendly dtype
    out = jnp.dot(attn, en, preferred_element_type=jnp.float32)   # (c_de, TP) f32
    gate = jax.nn.sigmoid(gate_ref[0].astype(jnp.float32))
    o_ref[0] = (out * gate).astype(o_ref.dtype)


# ------------------------------- wrapper -------------------------------------

_VMEM_LIMIT_BYTES = 48 * 1024 * 1024   # < v7x 64 MiB physical; lifts v5e's 16 MiB default
_FUSED_VMEM_BUDGET = 32 * 1024 * 1024  # per-batch working set allowed for the fused path
_TILE_VMEM_BUDGET = 12 * 1024 * 1024   # per-grid-step block budget for the tiled fallback
_MAX_TILE_LANES = 8192                 # bounds live f32 temporaries in the apply step


def _pick_tile(hw, per_lane_bytes, budget_bytes, max_lanes=_MAX_TILE_LANES):
    """Largest multiple-of-128 divisor of hw whose per-step VMEM footprint fits."""
    best = 128
    limit = min(hw, max_lanes)
    for t in range(128, limit + 1, 128):
        if hw % t == 0 and t * per_lane_bytes <= budget_bytes:
            best = t
    return min(best, hw)


@partial(jax.jit, static_argnames=("force_tiled",))
def lrm_forward(input_en, input_de, gate_map, force_tiled=False):
    """input_en: (b, c_en, h, w); input_de: (b, c_de, h, w);
    gate_map: (b, 1, h, w) or (b, c_de, h, w)  [all NCHW]."""
    b, c_de, h, w = input_de.shape
    c_en = input_en.shape[1]
    gc = gate_map.shape[1]
    hw = h * w
    itemsize = jnp.dtype(input_en.dtype).itemsize

    # Free views (only trailing spatial dims flattened, no transposes).
    de = input_de.reshape(b, c_de, hw)
    en = input_en.reshape(b, c_en, hw)
    gate = gate_map.reshape(b, gc, hw)

    # ---------------- fused single-pass path --------------------------------
    # Per-batch working set: double-buffered (de, en, gate, out) slabs plus
    # the f32 temporaries for (attn @ en) and sigmoid(gate).
    fused_bytes = (2 * hw * itemsize * (2 * c_de + c_en + gc)
                   + 4 * hw * (c_de + gc)
                   + 8 * c_de * c_en)
    if (not force_tiled) and fused_bytes <= _FUSED_VMEM_BUDGET:
        out = pl.pallas_call(
            _lrm_fused_kernel,
            out_shape=jax.ShapeDtypeStruct((b, c_de, hw), input_en.dtype),
            grid_spec=pltpu.PrefetchScalarGridSpec(
                num_scalar_prefetch=0,
                grid=(b,),
                in_specs=[
                    pl.BlockSpec((1, c_de, hw), lambda bi: (bi, 0, 0)),
                    pl.BlockSpec((1, c_en, hw), lambda bi: (bi, 0, 0)),
                    pl.BlockSpec((1, gc, hw), lambda bi: (bi, 0, 0)),
                ],
                out_specs=pl.BlockSpec((1, c_de, hw), lambda bi: (bi, 0, 0)),
            ),
            compiler_params=pltpu.CompilerParams(
                dimension_semantics=("parallel",),
                vmem_limit_bytes=_VMEM_LIMIT_BYTES),
        )(de, en, gate)
        return out.reshape(b, c_de, h, w)

    # ---------------- tiled two-pass fallback --------------------------------
    # Keep stores lane-dense: zero-pad the pixel axis to a multiple of 128.
    # Zero pixels add nothing to the energy reduction and are sliced off below.
    hw_pad = ((hw + 127) // 128) * 128
    if hw_pad != hw:
        pad = ((0, 0), (0, 0), (0, hw_pad - hw))
        de, en, gate = jnp.pad(de, pad), jnp.pad(en, pad), jnp.pad(gate, pad)

    per_lane_p1 = 2 * (c_de + c_en) * itemsize
    per_lane_p2 = 2 * (c_de + c_en + gc) * itemsize + 4 * (c_de + gc)
    tile_p = _pick_tile(hw_pad, max(per_lane_p1, per_lane_p2), _TILE_VMEM_BUDGET)
    n_tiles = hw_pad // tile_p

    # pass 1: per-batch channel-attention map (reduction over pixel tiles).
    # (On v7x with b == 1 this pass runs on a single TensorCore; splitting the
    #  spatial reduction into two parallel halves would use both TCs.)
    attn = pl.pallas_call(
        _energy_attn_kernel,
        out_shape=jax.ShapeDtypeStruct((b, c_de, c_en), jnp.float32),
        grid_spec=pltpu.PrefetchScalarGridSpec(
            num_scalar_prefetch=0,
            grid=(b, n_tiles),
            in_specs=[
                pl.BlockSpec((1, c_de, tile_p), lambda bi, si: (bi, 0, si)),
                pl.BlockSpec((1, c_en, tile_p), lambda bi, si: (bi, 0, si)),
            ],
            out_specs=pl.BlockSpec((1, c_de, c_en), lambda bi, si: (bi, 0, 0)),
            scratch_shapes=[pltpu.VMEM((c_de, c_en), jnp.float32)],
        ),
        compiler_params=pltpu.CompilerParams(
            dimension_semantics=("parallel", "arbitrary"),
            vmem_limit_bytes=_VMEM_LIMIT_BYTES),
    )(de, en)

    # pass 2: redistribute encoder features + spatial gating (lane-dense store).
    out = pl.pallas_call(
        _apply_kernel,
        out_shape=jax.ShapeDtypeStruct((b, c_de, hw_pad), input_en.dtype),
        grid_spec=pltpu.PrefetchScalarGridSpec(
            num_scalar_prefetch=0,
            grid=(b, n_tiles),
            in_specs=[
                pl.BlockSpec((1, c_de, c_en), lambda bi, si: (bi, 0, 0)),
                pl.BlockSpec((1, c_en, tile_p), lambda bi, si: (bi, 0, si)),
                pl.BlockSpec((1, gc, tile_p), lambda bi, si: (bi, 0, si)),
            ],
            out_specs=pl.BlockSpec((1, c_de, tile_p), lambda bi, si: (bi, 0, si)),
        ),
        compiler_params=pltpu.CompilerParams(
            dimension_semantics=("parallel", "parallel"),
            vmem_limit_bytes=_VMEM_LIMIT_BYTES),
    )(attn, en, gate)

    if hw_pad != hw:
        out = out[:, :, :hw]
    return out.reshape(b, c_de, h, w)


# ------------------------------- reference -----------------------------------

def _reference(input_en, input_de, gate_map):
    """Pure-JAX reference mirroring the PyTorch LRM.forward (NCHW)."""
    b, c_de, h, w = input_de.shape
    c_en = input_en.shape[1]
    en = input_en.reshape(b, c_en, h * w)
    de = input_de.reshape(b, c_de, h * w)
    energy = jnp.einsum("bij,bkj->bik", de, en)                 # (b, c_de, c_en)
    energy_new = jnp.max(energy, axis=-1, keepdims=True) - energy
    attn = jax.nn.softmax(energy_new, axis=-1)
    out = jnp.einsum("bik,bkj->bij", attn, en).reshape(b, c_de, h, w)
    return out * jax.nn.sigmoid(gate_map)


if __name__ == "__main__":
    key = jax.random.PRNGKey(0)
    k1, k2, k3 = jax.random.split(key, 3)

    # Small shapes consistent with the module (c_en encoder, c_de decoder).
    b, c_en, c_de, h, w = 2, 64, 32, 16, 16

    input_en = jax.random.normal(k1, (b, c_en, h, w), dtype=jnp.float32)
    input_de = jax.random.normal(k2, (b, c_de, h, w), dtype=jnp.float32)
    gate_map = jax.random.normal(k3, (b, 1, h, w), dtype=jnp.float32)  # spatial gate

    y_ref = _reference(input_en, input_de, gate_map)

    # Default (fused single-pass) path.
    y = jax.block_until_ready(lrm_forward(input_en, input_de, gate_map))
    assert y.shape == (b, c_de, h, w)
    assert jnp.allclose(y, y_ref, atol=1e-4, rtol=1e-4), "fused path mismatch"

    # Tiled two-pass fallback path (exercised explicitly for coverage).
    y2 = jax.block_until_ready(
        lrm_forward(input_en, input_de, gate_map, force_tiled=True))
    assert jnp.allclose(y2, y_ref, atol=1e-4, rtol=1e-4), "tiled path mismatch"

    print("KERNEL_OK")
</pallas_src>

<mosaic_0001>
module attributes {stable_mosaic.version = 11 : i64} {
  func.func @_lrm_fused_kernel(%arg0: i32, %arg1: memref<1x32x256xf32, #tpu.memory_space<vmem>>, %arg2: memref<1x64x256xf32, #tpu.memory_space<vmem>>, %arg3: memref<1x1x256xf32, #tpu.memory_space<vmem>>, %arg4: memref<1x32x256xf32, #tpu.memory_space<vmem>>) attributes {dimension_semantics = [#tpu.dimension_semantics<parallel>], iteration_bounds = array<i64: 2>, scalar_prefetch = 0 : i64, scratch_operands = 0 : i64, tpu.core_type = #tpu.core_type<tc>, window_params = [{transform_indices = @transform_0, window_bounds = array<i64: 1, 32, 256>}, {transform_indices = @transform_1, window_bounds = array<i64: 1, 64, 256>}, {transform_indices = @transform_2, window_bounds = array<i64: 1, 1, 256>}, {transform_indices = @transform_3, window_bounds = array<i64: 1, 32, 256>}]} {
    %c0 = arith.constant 0 : index
    %c0_0 = arith.constant 0 : index
    %c0_1 = arith.constant 0 : index
    %0 = vector.load %arg1[%c0, %c0_0, %c0_1] : memref<1x32x256xf32, #tpu.memory_space<vmem>>, vector<1x32x256xf32>
    %1 = vector.shape_cast %0 : vector<1x32x256xf32> to vector<32x256xf32>
    %c0_2 = arith.constant 0 : index
    %c0_3 = arith.constant 0 : index
    %c0_4 = arith.constant 0 : index
    %2 = vector.load %arg2[%c0_2, %c0_3, %c0_4] : memref<1x64x256xf32, #tpu.memory_space<vmem>>, vector<1x64x256xf32>
    %3 = vector.shape_cast %2 : vector<1x64x256xf32> to vector<64x256xf32>
    %cst = arith.constant dense<0.000000e+00> : vector<32x64xf32>
    %4 = tpu.matmul %1, %3, %cst {dimension_numbers = #tpu.dot_dimension_numbers<[1], [1], [0], [0], [0, 0, 1, 0], [], []>} : vector<32x256xf32>, vector<64x256xf32>, vector<32x64xf32> -> vector<32x64xf32>
    %cst_5 = arith.constant dense<0xFF800000> : vector<32xf32>
    %5 = vector.multi_reduction <maximumf>, %4, %cst_5 [1] : vector<32x64xf32> to vector<32xf32>
    %6 = vector.shape_cast %5 : vector<32xf32> to vector<32x1xf32>
    %7 = vector.broadcast %6 : vector<32x1xf32> to vector<32x64xf32>
    %8 = arith.subf %7, %4 : vector<32x64xf32>
    %cst_6 = arith.constant dense<0xFF800000> : vector<32xf32>
    %9 = vector.multi_reduction <maximumf>, %8, %cst_6 [1] : vector<32x64xf32> to vector<32xf32>
    %10 = vector.shape_cast %9 : vector<32xf32> to vector<32x1xf32>
    %11 = vector.broadcast %10 : vector<32x1xf32> to vector<32x64xf32>
    %12 = arith.subf %8, %11 : vector<32x64xf32>
    %13 = math.exp %12 : vector<32x64xf32>
    %cst_7 = arith.constant dense<0.000000e+00> : vector<32xf32>
    %14 = vector.multi_reduction <add>, %13, %cst_7 [1] : vector<32x64xf32> to vector<32xf32>
    %15 = vector.shape_cast %14 : vector<32xf32> to vector<32x1xf32>
    %16 = vector.broadcast %15 : vector<32x1xf32> to vector<32x64xf32>
    %17 = arith.divf %13, %16 : vector<32x64xf32>
    %cst_8 = arith.constant dense<0.000000e+00> : vector<32x256xf32>
    %18 = tpu.matmul %17, %3, %cst_8 {dimension_numbers = #tpu.dot_dimension_numbers<[1], [0], [0], [1], [0, 0, 1, 1], [], []>} : vector<32x64xf32>, vector<64x256xf32>, vector<32x256xf32> -> vector<32x256xf32>
    %c0_9 = arith.constant 0 : index
    %c0_10 = arith.constant 0 : index
    %c0_11 = arith.constant 0 : index
    %19 = vector.load %arg3[%c0_9, %c0_10, %c0_11] : memref<1x1x256xf32, #tpu.memory_space<vmem>>, vector<1x1x256xf32>
    %20 = vector.shape_cast %19 : vector<1x1x256xf32> to vector<1x256xf32>
    %21 = arith.negf %20 : vector<1x256xf32>
    %22 = math.exp %21 : vector<1x256xf32>
    %cst_12 = arith.constant 1.000000e+00 : f32
    %23 = vector.broadcast %cst_12 : f32 to vector<1x256xf32>
    %24 = arith.addf %23, %22 : vector<1x256xf32>
    %25 = arith.divf %23, %24 : vector<1x256xf32>
    %26 = vector.broadcast %25 : vector<1x256xf32> to vector<32x256xf32>
    %27 = arith.mulf %18, %26 : vector<32x256xf32>
    %c0_13 = arith.constant 0 : index
    %c0_14 = arith.constant 0 : index
    %c0_15 = arith.constant 0 : index
    %28 = vector.load %arg4[%c0_13, %c0_14, %c0_15] : memref<1x32x256xf32, #tpu.memory_space<vmem>>, vector<1x32x256xf32>
    %29 = vector.shape_cast %28 : vector<1x32x256xf32> to vector<32x256xf32>
    %30 = vector.shape_cast %27 : vector<32x256xf32> to vector<1x32x256xf32>
    tpu.vector_store %arg4[%c0_13, %c0_14, %c0_15], %30 {strides = array<i32>} : memref<1x32x256xf32, #tpu.memory_space<vmem>>, vector<1x32x256xf32>,
    return
  }
  func.func @transform_0(%arg0: i32) -> (i32, i32, i32) {
    %c0_i32 = arith.constant 0 : i32
    %c0_i32_0 = arith.constant 0 : i32
    %c0_i32_1 = arith.constant 0 : i32
    return %arg0, %c0_i32, %c0_i32_0 : i32, i32, i32
  }
  func.func @transform_1(%arg0: i32) -> (i32, i32, i32) {
    %c0_i32 = arith.constant 0 : i32
    %c0_i32_0 = arith.constant 0 : i32
    %c0_i32_1 = arith.constant 0 : i32
    return %arg0, %c0_i32, %c0_i32_0 : i32, i32, i32
  }
  func.func @transform_2(%arg0: i32) -> (i32, i32, i32) {
    %c0_i32 = arith.constant 0 : i32
    %c0_i32_0 = arith.constant 0 : i32
    %c0_i32_1 = arith.constant 0 : i32
    return %arg0, %c0_i32, %c0_i32_0 : i32, i32, i32
  }
  func.func @transform_3(%arg0: i32) -> (i32, i32, i32) {
    %c0_i32 = arith.constant 0 : i32
    %c0_i32_0 = arith.constant 0 : i32
    %c0_i32_1 = arith.constant 0 : i32
    return %arg0, %c0_i32, %c0_i32_0 : i32, i32, i32
  }
}

</mosaic_0001>

<llo_original>
// kernel: lrm_forward.1
$region0: #{lrm_forward.1}
  #allocation0 [shape = 'u32[]', space=smem, size = 0x4, offset = 0x4, fixed_abs, tag = 'smem constant byte address 0x4 - core index']
  #allocation1 [shape = 'u32[72,128]{1,0:T(1,128)}', space=vmem, size = 0x9000, scoped, tag = 'internal scratch']
  %s0 = inlined_call_operand.vmem [shape: f32[2,32,256], index: 0, kind: input, shape index: {}]
  %s1 = inlined_call_operand.vmem [shape: f32[2,64,256], index: 1, kind: input, shape index: {}]
  %s2 = inlined_call_operand.vmem [shape: f32[2,1,256], index: 2, kind: input, shape index: {}]
  %s3 = inlined_call_operand.vmem [shape: f32[2,32,256], index: 3, kind: output, shape index: {}]
  %s4 = sld [smem:[#allocation0]]
  $region45: #{lrm_forward.1} parent=0
    _
  %s6 = ssub.s32 1, %s4
  %s7 = scalar_select 0, %s6, %s4
  loop: start=0, step=1, limit=4
  $region2: #{lrm_forward.1} parent=0 // loop_pre_header
    _
  $region3: #{lrm_forward.1} parent=0 // loop_header
    %s9 = sphi 0, %s13
    %p10 = scmp.ge.s32.totalorder %s9, 4
    %s19 = sphi 0, %s21
    %s22 = sphi 0, %s19
    %s23 = sphi 0, %s22
    %s39 = sphi 0, %s23
    %s45 = sphi 0, %s47
    %s48 = sphi 0, %s45
    %s49 = sphi 0, %s48
    %s65 = sphi 0, %s49
    %s71 = sphi 0, %s73
    %s74 = sphi 0, %s71
    %s75 = sphi 0, %s74
    %s91 = sphi 0, %s75
    %s97 = sphi 0, %s99
    %s100 = sphi 0, %s97
    %s101 = sphi 0, %s100
    %s117 = sphi 0, %s101
  $region4: #{lrm_forward.1} parent=0 // loop_header_branch
    %12 = sbr.rel (%p10) target = $region8
  $region5: #{lrm_forward.1} parent=0 // loop_body
    %s14 = ssub.s32 %s9, 1
    %s15 = ssub.s32 %s9, 2
    %s16 = sadd.s32 %s9, 1
    %s17 = ssub.s32 %s9, %s16
    %p18 = scmp.eq.s32.totalorder %s17, 0
    %s20 = sadd.s32 %s19, 1
    %s21 = scalar_select %p18, %s19, %s20
    %p24 = pneg %p18
    %p25 = scmp.eq.s32.totalorder %s9, 1
    %p26 = por %p24, %p25
    %p27 = scmp.ne.s32.totalorder %s19, %s22
    %p28 = scmp.eq.s32.totalorder %s9, 0
    %p29 = por %p27, %p28
    %p30 = scmp.ne.s32.totalorder %s19, %s22
    %p31 = scmp.eq.s32.totalorder %s14, 1
    %p32 = por %p30, %p31
    %p33 = scmp.ne.s32.totalorder %s22, %s23
    %p34 = scmp.eq.s32.totalorder %s14, 0
    %p35 = por %p33, %p34
    %p36 = scmp.ne.s32.totalorder %s22, %s23
    %p37 = scmp.eq.s32.totalorder %s15, 1
    %p38 = por %p36, %p37
    %p40 = scmp.ne.s32.totalorder %s23, %s39
    %p41 = scmp.eq.s32.totalorder %s15, 0
    %p42 = por %p40, %p41
    %s43 = ssub.s32 %s9, %s16
    %p44 = scmp.eq.s32.totalorder %s43, 0
    %s46 = sadd.s32 %s45, 1
    %s47 = scalar_select %p44, %s45, %s46
    %p50 = pneg %p44
    %p51 = scmp.eq.s32.totalorder %s9, 1
    %p52 = por %p50, %p51
    %p53 = scmp.ne.s32.totalorder %s45, %s48
    %p54 = scmp.eq.s32.totalorder %s9, 0
    %p55 = por %p53, %p54
    %p56 = scmp.ne.s32.totalorder %s45, %s48
    %p57 = scmp.eq.s32.totalorder %s14, 1
    %p58 = por %p56, %p57
    %p59 = scmp.ne.s32.totalorder %s48, %s49
    %p60 = scmp.eq.s32.totalorder %s14, 0
    %p61 = por %p59, %p60
    %p62 = scmp.ne.s32.totalorder %s48, %s49
    %p63 = scmp.eq.s32.totalorder %s15, 1
    %p64 = por %p62, %p63
    %p66 = scmp.ne.s32.totalorder %s49, %s65
    %p67 = scmp.eq.s32.totalorder %s15, 0
    %p68 = por %p66, %p67
    %s69 = ssub.s32 %s9, %s16
    %p70 = scmp.eq.s32.totalorder %s69, 0
    %s72 = sadd.s32 %s71, 1
    %s73 = scalar_select %p70, %s71, %s72
    %p76 = pneg %p70
    %p77 = scmp.eq.s32.totalorder %s9, 1
    %p78 = por %p76, %p77
    %p79 = scmp.ne.s32.totalorder %s71, %s74
    %p80 = scmp.eq.s32.totalorder %s9, 0
    %p81 = por %p79, %p80
    %p82 = scmp.ne.s32.totalorder %s71, %s74
    %p83 = scmp.eq.s32.totalorder %s14, 1
    %p84 = por %p82, %p83
    %p85 = scmp.ne.s32.totalorder %s74, %s75
    %p86 = scmp.eq.s32.totalorder %s14, 0
    %p87 = por %p85, %p86
    %p88 = scmp.ne.s32.totalorder %s74, %s75
    %p89 = scmp.eq.s32.totalorder %s15, 1
    %p90 = por %p88, %p89
    %p92 = scmp.ne.s32.totalorder %s75, %s91
    %p93 = scmp.eq.s32.totalorder %s15, 0
    %p94 = por %p92, %p93
    %s95 = ssub.s32 %s9, %s16
    %p96 = scmp.eq.s32.totalorder %s95, 0
    %s98 = sadd.s32 %s97, 1
    %s99 = scalar_select %p96, %s97, %s98
    %p102 = pneg %p96
    %p103 = scmp.eq.s32.totalorder %s9, 1
    %p104 = por %p102, %p103
    %p105 = scmp.ne.s32.totalorder %s97, %s100
    %p106 = scmp.eq.s32.totalorder %s9, 0
    %p107 = por %p105, %p106
    %p108 = scmp.ne.s32.totalorder %s97, %s100
    %p109 = scmp.eq.s32.totalorder %s14, 1
    %p110 = por %p108, %p109
    %p111 = scmp.ne.s32.totalorder %s100, %s101
    %p112 = scmp.eq.s32.totalorder %s14, 0
    %p113 = por %p111, %p112
    %p114 = scmp.ne.s32.totalorder %s100, %s101
    %p115 = scmp.eq.s32.totalorder %s15, 1
    %p116 = por %p114, %p115
    %p118 = scmp.ne.s32.totalorder %s101, %s117
    %p119 = scmp.eq.s32.totalorder %s15, 0
    %p120 = por %p118, %p119
    %p121 = scmp.le.s32.totalorder 1, %s9
    %p122 = scmp.lt.s32.totalorder %s9, 3
    %p123 = pnand %p121, %p122
    %p124 = pneg %p123
    // Predicated region
    $region9: #{lrm_forward.1} parent=5 // pred_check
      _
    $region10: #{lrm_forward.1} parent=5 // pred_check_branch
      %126 = sbr.rel (%p123) target = $region12
    $region11: #{lrm_forward.1} parent=5 // pred_region
      %s127 = ssub.s32 %s9, 1
    $region12: #{lrm_forward.1} parent=5 // pred_fallthru
      _
    %p128 = scmp.lt.s32.totalorder %s9, 2
    // Predicated region
    $region13: #{lrm_forward.1} parent=5 // pred_check
      %p129 = pneg %p128
    $region14: #{lrm_forward.1} parent=5 // pred_check_branch
      %131 = sbr.rel (%p129) target = $region16
    $region15: #{lrm_forward.1} parent=5 // pred_region
      // Predicated region
      $region17: #{lrm_forward.1} parent=15 // pred_check
        %p132 = pneg %p29
      $region18: #{lrm_forward.1} parent=15 // pred_check_branch
        %134 = sbr.rel (%p132) target = $region20
      $region19: #{lrm_forward.1} parent=15 // pred_region
        %p135 = scmp.lt.s32.totalorder %s9, 1
        %s136 = scalar_select %p135, %s9, 1
        %s137 = smul.addr %s136, 8
        %s138 = smul.addr %s137, 8
        %s139 = scalar_lea.vmem %s0, %s138
      $region20: #{lrm_forward.1} parent=15 // pred_fallthru
        _
      // Predicated region
      $region21: #{lrm_forward.1} parent=15 // pred_check
        %p140 = pneg %p55
      $region22: #{lrm_forward.1} parent=15 // pred_check_branch
        %142 = sbr.rel (%p140) target = $region24
      $region23: #{lrm_forward.1} parent=15 // pred_region
        %p143 = scmp.lt.s32.totalorder %s9, 1
        %s144 = scalar_select %p143, %s9, 1
        %s145 = smul.addr %s144, 16
        %s146 = smul.addr %s145, 8
        %s147 = scalar_lea.vmem %s1, %s146
      $region24: #{lrm_forward.1} parent=15 // pred_fallthru
        _
      // Predicated region
      $region25: #{lrm_forward.1} parent=15 // pred_check
        %p148 = pneg %p81
      $region26: #{lrm_forward.1} parent=15 // pred_check_branch
        %150 = sbr.rel (%p148) target = $region28
      $region27: #{lrm_forward.1} parent=15 // pred_region
        %p151 = scmp.lt.s32.totalorder %s9, 1
        %s152 = scalar_select %p151, %s9, 1
        %s153 = smul.addr %s152, 2
        %s154 = scalar_lea.vmem %s2, %s153
      $region28: #{lrm_forward.1} parent=15 // pred_fallthru
        _
    $region16: #{lrm_forward.1} parent=5 // pred_fallthru
      _
    %p155 = scmp.le.s32.totalorder 1, %s9
    %p156 = scmp.lt.s32.totalorder %s9, 3
    %p157 = pnand %p155, %p156
    %p158 = pneg %p157
    // Predicated region
    $region29: #{lrm_forward.1} parent=5 // pred_check
      _
    $region30: #{lrm_forward.1} parent=5 // pred_check_branch
      %160 = sbr.rel (%p157) target = $region32
    $region31: #{lrm_forward.1} parent=5 // pred_region
      %s161 = ssub.s32 %s9, 1
      %p162 = scmp.lt.s32.totalorder %s14, 1
      %s163 = scalar_select %p162, %s14, 1
      %s164 = smul.addr %s163, 8
      %s165 = smul.addr %s164, 8
      %s166 = scalar_lea.vmem %s0, %s165
      %p167 = pneg %p35
      %p168 = pneg %p32
      %p169 = scmp.lt.s32.totalorder %s14, 1
      %s170 = scalar_select %p169, %s14, 1
      %s171 = smul.addr %s170, 16
      %s172 = smul.addr %s171, 8
      %s173 = scalar_lea.vmem %s1, %s172
      %p174 = pneg %p61
      %p175 = pneg %p58
      %p176 = scmp.lt.s32.totalorder %s14, 1
      %s177 = scalar_select %p176, %s14, 1
      %s178 = smul.addr %s177, 2
      %s179 = scalar_lea.vmem %s2, %s178
      %p180 = pneg %p87
      %p181 = pneg %p84
      %p182 = pneg %p113
      %p183 = pneg %p110
      %p184 = scmp.lt.s32.totalorder %s14, 1
      %s185 = scalar_select %p184, %s14, 1
      %s186 = smul.addr %s185, 8
      %s187 = smul.addr %s186, 8
      %s188 = scalar_lea.vmem %s3, %s187
      %p189 = scmp.lt.s32.totalorder %s14, 1
      %s190 = scalar_select %p189, %s14, 1
      %s191 = smul.addr %s190, 8
      %s192 = smul.addr %s191, 8
      %s193 = scalar_lea.vmem %s0, %s192
      %p194 = scmp.lt.s32.totalorder %s14, 1
      %s195 = scalar_select %p194, %s14, 1
      %s196 = smul.addr %s195, 16
      %s197 = smul.addr %s196, 8
      %s198 = scalar_lea.vmem %s1, %s197
      %p199 = scmp.lt.s32.totalorder %s14, 1
      %s200 = scalar_select %p199, %s14, 1
      %s201 = smul.addr %s200, 2
      %s202 = scalar_lea.vmem %s2, %s201
      %p203 = scmp.lt.s32.totalorder %s14, 1
      %s204 = scalar_select %p203, %s14, 1
      %s205 = smul.addr %s204, 8
      %s206 = smul.addr %s205, 8
      %s207 = scalar_lea.vmem %s3, %s206
      %v208 = vld [vmem:[%s193] sm:$0xff]
      %v209 = vld [vmem:[%s193 + $0x8] sm:$0xff]
      %v210 = vld [vmem:[%s193 + $0x10] sm:$0xff]
      %v211 = vld [vmem:[%s193 + $0x18] sm:$0xff]
      %v212 = vld [vmem:[%s193 + $0x20] sm:$0xff]
      %v213 = vld [vmem:[%s193 + $0x28] sm:$0xff]
      %v214 = vld [vmem:[%s193 + $0x30] sm:$0xff]
      %v215 = vld [vmem:[%s193 + $0x38] sm:$0xff]
      %v216 = vld [vmem:[%s198] sm:$0xff]
      %v217 = vld [vmem:[%s198 + $0x8] sm:$0xff]
      %v218 = vld [vmem:[%s198 + $0x10] sm:$0xff]
      %v219 = vld [vmem:[%s198 + $0x18] sm:$0xff]
      %v220 = vld [vmem:[%s198 + $0x20] sm:$0xff]
      %v221 = vld [vmem:[%s198 + $0x28] sm:$0xff]
      %v222 = vld [vmem:[%s198 + $0x30] sm:$0xff]
      %v223 = vld [vmem:[%s198 + $0x38] sm:$0xff]
      %v224 = vld [vmem:[%s198 + $0x40] sm:$0xff]
      %v225 = vld [vmem:[%s198 + $0x48] sm:$0xff]
      %v226 = vld [vmem:[%s198 + $0x50] sm:$0xff]
      %v227 = vld [vmem:[%s198 + $0x58] sm:$0xff]
      %v228 = vld [vmem:[%s198 + $0x60] sm:$0xff]
      %v229 = vld [vmem:[%s198 + $0x68] sm:$0xff]
      %v230 = vld [vmem:[%s198 + $0x70] sm:$0xff]
      %v231 = vld [vmem:[%s198 + $0x78] sm:$0xff]
      %232 = vmatpush.xpose.msra.mxu0 0.0
      %233 = vmatpush.xpose.msra.mxu0 0.0
      %234 = vmatpush.xpose.msra.mxu0 0.0
      %235 = vmatpush.xpose.msra.mxu0 0.0
      %236 = vmatpush.xpose.msra.mxu0 0.0
      %237 = vmatpush.xpose.msra.mxu0 0.0
      %238 = vmatpush.xpose.msra.mxu0 0.0
      %239 = vmatpush.xpose.msra.mxu0 0.0
      %240 = vmatpush.xpose.msra.mxu0 %v230
      %241 = vmatpush.xpose.msra.mxu0 %v228
      %242 = vmatpush.xpose.msra.mxu0 %v226
      %243 = vmatpush.xpose.msra.mxu0 %v224
      %244 = vmatpush.xpose.msra.mxu0 %v222
      %245 = vmatpush.xpose.msra.mxu0 %v220
      %246 = vmatpush.xpose.msra.mxu0 %v218
      %247 = vmatpush.xpose.msra.mxu0 %v216
      %248 = vmatmul.f32.gmra.mxu0 %v208
      %v249 = vpop.f32.mrf.mxu0
      %v250 = vadd.f32 0.0, %v249
      %251 = vmatmul.f32.gmra.mxu0 %v210
      %v252 = vpop.f32.mrf.mxu0
      %v253 = vadd.f32 0.0, %v252
      %254 = vmatmul.f32.gmra.mxu0 %v212
      %v255 = vpop.f32.mrf.mxu0
      %v256 = vadd.f32 0.0, %v255
      %257 = vmatmul.f32.gmra.mxu0 %v214
      %v258 = vpop.f32.mrf.mxu0
      %v259 = vadd.f32 0.0, %v258
      %260 = vdwg.mxu0
      %261 = vmatpush.xpose.msra.mxu0 0.0
      %262 = vmatpush.xpose.msra.mxu0 0.0
      %263 = vmatpush.xpose.msra.mxu0 0.0
      %264 = vmatpush.xpose.msra.mxu0 0.0
      %265 = vmatpush.xpose.msra.mxu0 0.0
      %266 = vmatpush.xpose.msra.mxu0 0.0
      %267 = vmatpush.xpose.msra.mxu0 0.0
      %268 = vmatpush.xpose.msra.mxu0 0.0
      %269 = vmatpush.xpose.msra.mxu0 %v231
      %270 = vmatpush.xpose.msra.mxu0 %v229
      %271 = vmatpush.xpose.msra.mxu0 %v227
      %272 = vmatpush.xpose.msra.mxu0 %v225
      %273 = vmatpush.xpose.msra.mxu0 %v223
      %274 = vmatpush.xpose.msra.mxu0 %v221
      %275 = vmatpush.xpose.msra.mxu0 %v219
      %276 = vmatpush.xpose.msra.mxu0 %v217
      %277 = vmatmul.f32.gmra.mxu0 %v209
      %v278 = vpop.f32.mrf.mxu0
      %v279 = vadd.f32 %v250, %v278
      %280 = vmatmul.f32.gmra.mxu0 %v211
      %v281 = vpop.f32.mrf.mxu0
      %v282 = vadd.f32 %v253, %v281
      %283 = vmatmul.f32.gmra.mxu0 %v213
      %v284 = vpop.f32.mrf.mxu0
      %v285 = vadd.f32 %v256, %v284
      %286 = vmatmul.f32.gmra.mxu0 %v215
      %v287 = vpop.f32.mrf.mxu0
      %v288 = vadd.f32 %v259, %v287
      %289 = vdwg.mxu0
      %vm290 = vcmask 523264
      %v291 = vsel %vm290, %v279, -inf
      %292 = vmax.xlane.f32.xlu0 %v291
      %v293 = vpop.xlane.xlu0 %292
      %v294 = vsel %vm290, %v282, -inf
      %295 = vmax.xlane.f32.xlu0 %v294
      %v296 = vpop.xlane.xlu0 %295
      %v297 = vsel %vm290, %v285, -inf
      %298 = vmax.xlane.f32.xlu0 %v297
      %v299 = vpop.xlane.xlu0 %298
      %v300 = vsel %vm290, %v288, -inf
      %301 = vmax.xlane.f32.xlu0 %v300
      %v302 = vpop.xlane.xlu0 %301
      %v303 = vsub.f32 %v293, %v279
      %v304 = vsub.f32 %v296, %v282
      %v305 = vsub.f32 %v299, %v285
      %v306 = vsub.f32 %v302, %v288
      %v307 = vsel %vm290, %v303, -inf
      %308 = vmax.xlane.f32.xlu0 %v307
      %v309 = vpop.xlane.xlu0 %308
      %v310 = vsel %vm290, %v304, -inf
      %311 = vmax.xlane.f32.xlu0 %v310
      %v312 = vpop.xlane.xlu0 %311
      %v313 = vsel %vm290, %v305, -inf
      %314 = vmax.xlane.f32.xlu0 %v313
      %v315 = vpop.xlane.xlu0 %314
      %v316 = vsel %vm290, %v306, -inf
      %317 = vmax.xlane.f32.xlu0 %v316
      %v318 = vpop.xlane.xlu0 %317
      %v319 = vsub.f32 %v303, %v309
      %v320 = vsub.f32 %v304, %v312
      %v321 = vsub.f32 %v305, %v315
      %v322 = vsub.f32 %v306, %v318
      %v323 = vmul.f32 %v319, 1.442695
      %v324 = vpow.pop %v323
      %v325 = vmul.f32 %v320, 1.442695
      %v326 = vpow.pop %v325
      %v327 = vmul.f32 %v321, 1.442695
      %v328 = vpow.pop %v327
      %v329 = vmul.f32 %v322, 1.442695
      %v330 = vpow.pop %v329
      %v331 = vsel %vm290, %v324, 0.0
      %332 = vadd.xlane.f32.xlu0 %v331
      %v333 = vpop.xlane.xlu0 %332
      %v334 = vsel %vm290, %v326, 0.0
      %335 = vadd.xlane.f32.xlu0 %v334
      %v336 = vpop.xlane.xlu0 %335
      %v337 = vsel %vm290, %v328, 0.0
      %338 = vadd.xlane.f32.xlu0 %v337
      %v339 = vpop.xlane.xlu0 %338
      %v340 = vsel %vm290, %v330, 0.0
      %341 = vadd.xlane.f32.xlu0 %v340
      %v342 = vpop.xlane.xlu0 %341
      %v343 = vrcp.pop %v333
      %v344 = vmul.f32 %v333, %v343
      %v345 = vsub.f32 1.0, %v344
      %v346 = vmul.f32 %v343, %v345
      %v347 = vadd.f32 %v343, %v346
      %vm348 = vweird.f32 %v333
      %vm349 = vweird.f32 %v343
      %vm350 = vmor %vm348, %vm349
      %v351 = vsel %vm350, %v343, %v347
      %v352 = vand.u32 2147483647, %v333
      %vm353 = vcmp.eq.f32.partialorder %v352, 8.507059e+37
      %v354 = vand.u32 %v333, 2147483648
      %v355 = vor.u32 1.1754944e-38, %v354
      %v356 = vsel %vm353, %v355, %v351
      %v357 = vmul.f32 %v324, %v356
      %v358 = vrcp.pop %v336
      %v359 = vmul.f32 %v336, %v358
      %v360 = vsub.f32 1.0, %v359
      %v361 = vmul.f32 %v358, %v360
      %v362 = vadd.f32 %v358, %v361
      %vm363 = vweird.f32 %v336
      %vm364 = vweird.f32 %v358
      %vm365 = vmor %vm363, %vm364
      %v366 = vsel %vm365, %v358, %v362
      %v367 = vand.u32 2147483647, %v336
      %vm368 = vcmp.eq.f32.partialorder %v367, 8.507059e+37
      %v369 = vand.u32 %v336, 2147483648
      %v370 = vor.u32 1.1754944e-38, %v369
      %v371 = vsel %vm368, %v370, %v366
      %v372 = vmul.f32 %v326, %v371
      %v373 = vrcp.pop %v339
      %v374 = vmul.f32 %v339, %v373
      %v375 = vsub.f32 1.0, %v374
      %v376 = vmul.f32 %v373, %v375
      %v377 = vadd.f32 %v373, %v376
      %vm378 = vweird.f32 %v339
      %vm379 = vweird.f32 %v373
      %vm380 = vmor %vm378, %vm379
      %v381 = vsel %vm380, %v373, %v377
      %v382 = vand.u32 2147483647, %v339
      %vm383 = vcmp.eq.f32.partialorder %v382, 8.507059e+37
      %v384 = vand.u32 %v339, 2147483648
      %v385 = vor.u32 1.1754944e-38, %v384
      %v386 = vsel %vm383, %v385, %v381
      %v387 = vmul.f32 %v328, %v386
      %v388 = vrcp.pop %v342
      %v389 = vmul.f32 %v342, %v388
      %v390 = vsub.f32 1.0, %v389
      %v391 = vmul.f32 %v388, %v390
      %v392 = vadd.f32 %v388, %v391
      %vm393 = vweird.f32 %v342
      %vm394 = vweird.f32 %v388
      %vm395 = vmor %vm393, %vm394
      %v396 = vsel %vm395, %v388, %v392
      %v397 = vand.u32 2147483647, %v342
      %vm398 = vcmp.eq.f32.partialorder %v397, 8.507059e+37
      %v399 = vand.u32 %v342, 2147483648
      %v400 = vor.u32 1.1754944e-38, %v399
      %v401 = vsel %vm398, %v400, %v396
      %v402 = vmul.f32 %v330, %v401
      %v404 = vsel %vm290, %v357, 0
      %v407 = vsel %vm290, %v372, 0
      %v410 = vsel %vm290, %v387, 0
      %v413 = vsel %vm290, %v402, 0
      %415 = vmatpush.msra.mxu0 0.0
      %416 = vmatpush.msra.mxu0 0.0
      %417 = vmatpush.msra.mxu0 0.0
      %418 = vmatpush.msra.mxu0 0.0
      %419 = vmatpush.msra.mxu0 0.0
      %420 = vmatpush.msra.mxu0 0.0
      %421 = vmatpush.msra.mxu0 0.0
      %422 = vmatpush.msra.mxu0 0.0
      %423 = vmatpush.msra.mxu0 %v230
      %424 = vmatpush.msra.mxu0 %v228
      %425 = vmatpush.msra.mxu0 %v226
      %426 = vmatpush.msra.mxu0 %v224
      %427 = vmatpush.msra.mxu0 %v222
      %428 = vmatpush.msra.mxu0 %v220
      %429 = vmatpush.msra.mxu0 %v218
      %430 = vmatpush.msra.mxu0 %v216
      %431 = vmatmul.f32.gmra.mxu0 %v404
      %v432 = vpop.f32.mrf.mxu0
      %v433 = vadd.f32 0.0, %v432
      %434 = vmatmul.f32.gmra.mxu0 %v407
      %v435 = vpop.f32.mrf.mxu0
      %v436 = vadd.f32 0.0, %v435
      %437 = vmatmul.f32.gmra.mxu0 %v410
      %v438 = vpop.f32.mrf.mxu0
      %v439 = vadd.f32 0.0, %v438
      %440 = vmatmul.f32.gmra.mxu0 %v413
      %v441 = vpop.f32.mrf.mxu0
      %v442 = vadd.f32 0.0, %v441
      %443 = vdwg.mxu0
      %444 = vmatpush.msra.mxu0 0.0
      %445 = vmatpush.msra.mxu0 0.0
      %446 = vmatpush.msra.mxu0 0.0
      %447 = vmatpush.msra.mxu0 0.0
      %448 = vmatpush.msra.mxu0 0.0
      %449 = vmatpush.msra.mxu0 0.0
      %450 = vmatpush.msra.mxu0 0.0
      %451 = vmatpush.msra.mxu0 0.0
      %452 = vmatpush.msra.mxu0 %v231
      %453 = vmatpush.msra.mxu0 %v229
      %454 = vmatpush.msra.mxu0 %v227
      %455 = vmatpush.msra.mxu0 %v225
      %456 = vmatpush.msra.mxu0 %v223
      %457 = vmatpush.msra.mxu0 %v221
      %458 = vmatpush.msra.mxu0 %v219
      %459 = vmatpush.msra.mxu0 %v217
      %460 = vmatmul.f32.gmra.mxu0 %v404
      %v461 = vpop.f32.mrf.mxu0
      %v462 = vadd.f32 0.0, %v461
      %463 = vmatmul.f32.gmra.mxu0 %v407
      %v464 = vpop.f32.mrf.mxu0
      %v465 = vadd.f32 0.0, %v464
      %466 = vmatmul.f32.gmra.mxu0 %v410
      %v467 = vpop.f32.mrf.mxu0
      %v468 = vadd.f32 0.0, %v467
      %469 = vmatmul.f32.gmra.mxu0 %v413
      %v470 = vpop.f32.mrf.mxu0
      %v471 = vadd.f32 0.0, %v470
      %472 = vdwg.mxu0
      %v473 = vld [vmem:[%s202] sm:$0x3]
      %v474 = vxor.u32 %v473, 2147483648
      %v475 = vmul.f32 %v474, 1.442695
      %v476 = vpow.pop %v475
      %v477 = vadd.f32 %v476, 1.0
      %v478 = vrcp.pop %v477
      %v479 = vmul.f32 %v477, %v478
      %v480 = vsub.f32 1.0, %v479
      %v481 = vmul.f32 %v478, %v480
      %v482 = vadd.f32 %v478, %v481
      %vm483 = vweird.f32 %v477
      %vm484 = vweird.f32 %v478
      %vm485 = vmor %vm483, %vm484
      %v486 = vsel %vm485, %v478, %v482
      %v487 = vand.u32 2147483647, %v477
      %vm488 = vcmp.eq.f32.partialorder %v487, 8.507059e+37
      %v489 = vand.u32 %v477, 2147483648
      %v490 = vor.u32 1.1754944e-38, %v489
      %v491 = vsel %vm488, %v490, %v486
      %v492 = vmul.f32 1.0, %v491
      %v494 = vperm.slane %v492, 0
      %v495 = vperm.slane %v492, 1
      %v498 = vmul.f32 %v433, %v494
      %v499 = vmul.f32 %v462, %v495
      %v500 = vmul.f32 %v436, %v494
      %v501 = vmul.f32 %v465, %v495
      %v502 = vmul.f32 %v439, %v494
      %v503 = vmul.f32 %v468, %v495
      %v504 = vmul.f32 %v442, %v494
      %v505 = vmul.f32 %v471, %v495
      %506 = vst [vmem:[%s207] sm:$0xff] %v498
      %507 = vst [vmem:[%s207 + $0x8] sm:$0xff] %v499
      %508 = vst [vmem:[%s207 + $0x10] sm:$0xff] %v500
      %509 = vst [vmem:[%s207 + $0x18] sm:$0xff] %v501
      %510 = vst [vmem:[%s207 + $0x20] sm:$0xff] %v502
      %511 = vst [vmem:[%s207 + $0x28] sm:$0xff] %v503
      %512 = vst [vmem:[%s207 + $0x30] sm:$0xff] %v504
      %513 = vst [vmem:[%s207 + $0x38] sm:$0xff] %v505
      %p514 = scmp.lt.s32.totalorder %s14, 1
      %s515 = scalar_select %p514, %s14, 1
      %s516 = smul.addr %s515, 8
      %s517 = smul.addr %s516, 8
      %s518 = scalar_lea.vmem %s3, %s517
      // Predicated region
      $region33: #{lrm_forward.1} parent=31 // pred_check
        %p519 = pneg %p110
      $region34: #{lrm_forward.1} parent=31 // pred_check_branch
        %521 = sbr.rel (%p519) target = $region36
      $region35: #{lrm_forward.1} parent=31 // pred_region
        _
      $region36: #{lrm_forward.1} parent=31 // pred_fallthru
        _
    $region32: #{lrm_forward.1} parent=5 // pred_fallthru
      _
    %p522 = scmp.le.s32.totalorder 2, %s9
    // Predicated region
    $region37: #{lrm_forward.1} parent=5 // pred_check
      %p523 = pneg %p522
    $region38: #{lrm_forward.1} parent=5 // pred_check_branch
      %525 = sbr.rel (%p523) target = $region40
    $region39: #{lrm_forward.1} parent=5 // pred_region
      %s526 = ssub.s32 %s9, 2
      // Predicated region
      $region41: #{lrm_forward.1} parent=39 // pred_check
        %p527 = pneg %p116
      $region42: #{lrm_forward.1} parent=39 // pred_check_branch
        %529 = sbr.rel (%p527) target = $region44
      $region43: #{lrm_forward.1} parent=39 // pred_region
        %p530 = scmp.lt.s32.totalorder %s15, 1
        %s531 = scalar_select %p530, %s15, 1
        %s532 = smul.addr %s531, 8
        %s533 = smul.addr %s532, 8
        %s534 = scalar_lea.vmem %s3, %s533
      $region44: #{lrm_forward.1} parent=39 // pred_fallthru
        _
    $region40: #{lrm_forward.1} parent=5 // pred_fallthru
      _
  $region6: #{lrm_forward.1} parent=0 // loop_footer
    %s13 = sadd.s32 1, %s9
  $region7: #{lrm_forward.1} parent=0 // loop_footer_branch
    %8 = sbr.rel target = $region3
  $region8: #{lrm_forward.1} parent=0 // loop_exit
    _

</llo_original>
